<compile_context>
chip_gen: v7x
topology: tpu7x:2x2x1
jax: 0.10.0
libtpu: 0.0.40
codegen_flags: <defaults>
</compile_context>

<pallas_src>
import jax
import jax.numpy as jnp
from jax.experimental import pallas as pl
from jax.experimental.pallas import tpu as pltpu


def mlp_kernel(xT_ref, w1_ref, b1_ref, w2_ref, b2_ref, w3_ref, b3_ref, o_ref):
    # xT: (F, TB) -- batch on lanes.  Weights in PyTorch (out, in) layout.
    xT = xT_ref[...]

    # Layer 1: (H1, F) @ (F, TB) on the MXU, f32 accumulation.
    h1 = jnp.dot(w1_ref[...], xT, preferred_element_type=jnp.float32)
    h1 = jnp.maximum(h1 + b1_ref[...], 0.0)                          # (H1, TB) f32

    # Layer 2: (H2, H1) @ (H1, TB) on the MXU, f32 accumulation.
    h2 = jnp.dot(w2_ref[...], h1.astype(w2_ref.dtype),
                 preferred_element_type=jnp.float32)
    h2 = jnp.maximum(h2 + b2_ref[...], 0.0)                          # (H2, TB) f32

    # Layer 3 (out_features == 1): no N=1 MXU pass -- VPU broadcast multiply
    # plus a sublane reduction on the XLU, both of which have slack here.
    z = jnp.sum(h2 * w3_ref[...], axis=0, keepdims=True) + b3_ref[...]  # (1, TB)
    o_ref[...] = jax.nn.sigmoid(z)


def backgammon_nn_forward(x, params, *, tile_b=512, use_bf16=False):
    """x: (B, input_size) float32 -> (B, 1) float32 (matches the PyTorch module)."""
    B, F = x.shape
    w1, b1 = params["w1"], params["b1"]        # (H1, F),  (H1, 1)
    w2, b2 = params["w2"], params["b2"]        # (H2, H1), (H2, 1)
    w3, b3 = params["w3"], params["b3"]        # (H2, 1),  (1, 1)

    # Lane-dense batch tiling: tiles are multiples of 128 lanes; the batch is
    # zero-padded up to a whole number of tiles (no B % tile_b restriction).
    tb = max(128, (tile_b // 128) * 128)
    tb = min(tb, ((B + 127) // 128) * 128)
    Bp = ((B + tb - 1) // tb) * tb
    num_tiles = Bp // tb

    xT = x.T                                   # (F, B): batch on the lane axis
    if Bp != B:
        xT = jnp.zeros((F, Bp), x.dtype).at[:, :B].set(xT)

    # Matmul operands optionally bf16 (v6e/v7x); accumulation and all
    # elementwise math stay f32 (also the right choice on v5e).
    mm_dtype = jnp.bfloat16 if use_bf16 else jnp.float32
    xT = xT.astype(mm_dtype)
    w1m = w1.astype(mm_dtype)
    w2m = w2.astype(mm_dtype)

    # Whole-array blocks with a constant index_map: loaded once, not re-DMA'd.
    full = lambda a: pl.BlockSpec(a.shape, lambda i: (0, 0))

    out = pl.pallas_call(
        mlp_kernel,
        out_shape=jax.ShapeDtypeStruct((1, Bp), jnp.float32),
        grid_spec=pltpu.PrefetchScalarGridSpec(
            num_scalar_prefetch=0,
            grid=(num_tiles,),
            in_specs=[
                pl.BlockSpec((F, tb), lambda i: (0, i)),   # x tile, batch on lanes
                full(w1m), full(b1),
                full(w2m), full(b2),
                full(w3), full(b3),
            ],
            out_specs=pl.BlockSpec((1, tb), lambda i: (0, i)),  # lane-dense output
        ),
        compiler_params=pltpu.CompilerParams(
            dimension_semantics=("parallel",),   # megacore sharding on v7x
        ),
    )(xT, w1m, b1, w2m, b2, w3, b3)

    return out[:, :B].T                         # (B, 1)


def init_params(key, input_size, hidden_sizes=(128, 64)):
    """Mirrors nn.Linear's U(-1/sqrt(fan_in), 1/sqrt(fan_in)) init.

    Weights are stored in PyTorch (out_features, in_features) layout; biases as
    (out_features, 1) columns (sublane broadcast in the transposed kernel).
    The last layer's weight is stored transposed, (in_features, 1), for the
    VPU broadcast-multiply path.
    """
    sizes = [input_size, *hidden_sizes, 1]
    n_layers = len(sizes) - 1
    params = {}
    for li, (fi, fo) in enumerate(zip(sizes[:-1], sizes[1:]), start=1):
        key, kw, kb = jax.random.split(key, 3)
        bound = float(fi) ** -0.5
        w = jax.random.uniform(kw, (fo, fi), jnp.float32, -bound, bound)
        b = jax.random.uniform(kb, (fo, 1), jnp.float32, -bound, bound)
        if li == n_layers:
            w = w.T                              # (H2, 1)
        params[f"w{li}"] = w
        params[f"b{li}"] = b
    return params


def reference_forward(x, params):
    h1 = jnp.maximum(x @ params["w1"].T + params["b1"].T, 0.0)
    h2 = jnp.maximum(h1 @ params["w2"].T + params["b2"].T, 0.0)
    return jax.nn.sigmoid(h2 @ params["w3"] + params["b3"].T)


if __name__ == "__main__":
    key = jax.random.PRNGKey(0)
    input_size = 32
    key, kp = jax.random.split(key)
    params = init_params(kp, input_size, hidden_sizes=(128, 64))

    # Small batch (single padded 128-lane tile).
    key, kx = jax.random.split(key)
    x_small = jax.random.normal(kx, (16, input_size), jnp.float32)
    out = jax.block_until_ready(backgammon_nn_forward(x_small, params))
    ref = reference_forward(x_small, params)
    assert out.shape == (16, 1)
    assert jnp.allclose(out, ref, atol=1e-5, rtol=1e-5), "f32 mismatch vs reference"

    # Ragged larger batch (multi-tile grid + zero-padded tail tile).
    key, kx = jax.random.split(key)
    x_big = jax.random.normal(kx, (300, input_size), jnp.float32)
    out = jax.block_until_ready(backgammon_nn_forward(x_big, params, tile_b=256))
    ref = reference_forward(x_big, params)
    assert out.shape == (300, 1)
    assert jnp.allclose(out, ref, atol=1e-5, rtol=1e-5), "f32 (ragged) mismatch"

    # bf16 matmul path (v6e/v7x recommendation); accumulation stays f32.
    out_bf16 = jax.block_until_ready(
        backgammon_nn_forward(x_big, params, tile_b=256, use_bf16=True))
    assert jnp.allclose(out_bf16, ref, atol=2e-2, rtol=2e-2), "bf16 mismatch vs reference"

    print("KERNEL_OK")
</pallas_src>

<mosaic_0001>
module attributes {stable_mosaic.version = 11 : i64} {
  func.func @mlp_kernel(%arg0: i32, %arg1: memref<32x128xf32, #tpu.memory_space<vmem>>, %arg2: memref<128x32xf32, #tpu.memory_space<vmem>>, %arg3: memref<128x1xf32, #tpu.memory_space<vmem>>, %arg4: memref<64x128xf32, #tpu.memory_space<vmem>>, %arg5: memref<64x1xf32, #tpu.memory_space<vmem>>, %arg6: memref<64x1xf32, #tpu.memory_space<vmem>>, %arg7: memref<1x1xf32, #tpu.memory_space<vmem>>, %arg8: memref<1x128xf32, #tpu.memory_space<vmem>>) attributes {dimension_semantics = [#tpu.dimension_semantics<parallel>], iteration_bounds = array<i64: 1>, scalar_prefetch = 0 : i64, scratch_operands = 0 : i64, tpu.core_type = #tpu.core_type<tc>, window_params = [{transform_indices = @transform_0, window_bounds = array<i64: 32, 128>}, {pipeline_mode = #tpu.pipeline_mode<synchronous>, transform_indices = @transform_1, window_bounds = array<i64: 128, 32>}, {pipeline_mode = #tpu.pipeline_mode<synchronous>, transform_indices = @transform_2, window_bounds = array<i64: 128, 1>}, {pipeline_mode = #tpu.pipeline_mode<synchronous>, transform_indices = @transform_3, window_bounds = array<i64: 64, 128>}, {pipeline_mode = #tpu.pipeline_mode<synchronous>, transform_indices = @transform_4, window_bounds = array<i64: 64, 1>}, {pipeline_mode = #tpu.pipeline_mode<synchronous>, transform_indices = @transform_5, window_bounds = array<i64: 64, 1>}, {pipeline_mode = #tpu.pipeline_mode<synchronous>, transform_indices = @transform_6, window_bounds = array<i64: 1, 1>}, {transform_indices = @transform_7, window_bounds = array<i64: 1, 128>}]} {
    %c0 = arith.constant 0 : index
    %c0_0 = arith.constant 0 : index
    %0 = vector.load %arg1[%c0, %c0_0] : memref<32x128xf32, #tpu.memory_space<vmem>>, vector<32x128xf32>
    %c0_1 = arith.constant 0 : index
    %c0_2 = arith.constant 0 : index
    %1 = vector.load %arg2[%c0_1, %c0_2] : memref<128x32xf32, #tpu.memory_space<vmem>>, vector<128x32xf32>
    %cst = arith.constant dense<0.000000e+00> : vector<128x128xf32>
    %2 = tpu.matmul %1, %0, %cst {dimension_numbers = #tpu.dot_dimension_numbers<[1], [0], [0], [1], [0, 0, 1, 1], [], []>} : vector<128x32xf32>, vector<32x128xf32>, vector<128x128xf32> -> vector<128x128xf32>
    %c0_3 = arith.constant 0 : index
    %c0_4 = arith.constant 0 : index
    %3 = vector.load %arg3[%c0_3, %c0_4] : memref<128x1xf32, #tpu.memory_space<vmem>>, vector<128x1xf32>
    %4 = vector.broadcast %3 : vector<128x1xf32> to vector<128x128xf32>
    %5 = arith.addf %2, %4 : vector<128x128xf32>
    %cst_5 = arith.constant 0.000000e+00 : f32
    %6 = vector.broadcast %cst_5 : f32 to vector<128x128xf32>
    %7 = arith.maximumf %5, %6 : vector<128x128xf32>
    %c0_6 = arith.constant 0 : index
    %c0_7 = arith.constant 0 : index
    %8 = vector.load %arg4[%c0_6, %c0_7] : memref<64x128xf32, #tpu.memory_space<vmem>>, vector<64x128xf32>
    %cst_8 = arith.constant dense<0.000000e+00> : vector<64x128xf32>
    %9 = tpu.matmul %8, %7, %cst_8 {dimension_numbers = #tpu.dot_dimension_numbers<[1], [0], [0], [1], [0, 0, 1, 1], [], []>} : vector<64x128xf32>, vector<128x128xf32>, vector<64x128xf32> -> vector<64x128xf32>
    %c0_9 = arith.constant 0 : index
    %c0_10 = arith.constant 0 : index
    %10 = vector.load %arg5[%c0_9, %c0_10] : memref<64x1xf32, #tpu.memory_space<vmem>>, vector<64x1xf32>
    %11 = vector.broadcast %10 : vector<64x1xf32> to vector<64x128xf32>
    %12 = arith.addf %9, %11 : vector<64x128xf32>
    %cst_11 = arith.constant 0.000000e+00 : f32
    %13 = vector.broadcast %cst_11 : f32 to vector<64x128xf32>
    %14 = arith.maximumf %12, %13 : vector<64x128xf32>
    %c0_12 = arith.constant 0 : index
    %c0_13 = arith.constant 0 : index
    %15 = vector.load %arg6[%c0_12, %c0_13] : memref<64x1xf32, #tpu.memory_space<vmem>>, vector<64x1xf32>
    %16 = vector.broadcast %15 : vector<64x1xf32> to vector<64x128xf32>
    %17 = arith.mulf %14, %16 : vector<64x128xf32>
    %cst_14 = arith.constant dense<0.000000e+00> : vector<128xf32>
    %18 = vector.multi_reduction <add>, %17, %cst_14 [0] : vector<64x128xf32> to vector<128xf32>
    %19 = vector.shape_cast %18 : vector<128xf32> to vector<1x128xf32>
    %c0_15 = arith.constant 0 : index
    %c0_16 = arith.constant 0 : index
    %20 = vector.load %arg7[%c0_15, %c0_16] : memref<1x1xf32, #tpu.memory_space<vmem>>, vector<1x1xf32>
    %21 = vector.broadcast %20 : vector<1x1xf32> to vector<1x128xf32>
    %22 = arith.addf %19, %21 : vector<1x128xf32>
    %23 = arith.negf %22 : vector<1x128xf32>
    %24 = math.exp %23 : vector<1x128xf32>
    %cst_17 = arith.constant 1.000000e+00 : f32
    %25 = vector.broadcast %cst_17 : f32 to vector<1x128xf32>
    %26 = arith.addf %25, %24 : vector<1x128xf32>
    %27 = arith.divf %25, %26 : vector<1x128xf32>
    %c0_18 = arith.constant 0 : index
    %c0_19 = arith.constant 0 : index
    %28 = vector.load %arg8[%c0_18, %c0_19] : memref<1x128xf32, #tpu.memory_space<vmem>>, vector<1x128xf32>
    tpu.vector_store %arg8[%c0_18, %c0_19], %27 {strides = array<i32>} : memref<1x128xf32, #tpu.memory_space<vmem>>, vector<1x128xf32>,
    return
  }
  func.func @transform_0(%arg0: i32) -> (i32, i32) {
    %c0_i32 = arith.constant 0 : i32
    %c0_i32_0 = arith.constant 0 : i32
    return %c0_i32, %arg0 : i32, i32
  }
  func.func @transform_1(%arg0: i32) -> (i32, i32) {
    %c0_i32 = arith.constant 0 : i32
    %c0_i32_0 = arith.constant 0 : i32
    %c0_i32_1 = arith.constant 0 : i32
    return %c0_i32, %c0_i32_0 : i32, i32
  }
  func.func @transform_2(%arg0: i32) -> (i32, i32) {
    %c0_i32 = arith.constant 0 : i32
    %c0_i32_0 = arith.constant 0 : i32
    %c0_i32_1 = arith.constant 0 : i32
    return %c0_i32, %c0_i32_0 : i32, i32
  }
  func.func @transform_3(%arg0: i32) -> (i32, i32) {
    %c0_i32 = arith.constant 0 : i32
    %c0_i32_0 = arith.constant 0 : i32
    %c0_i32_1 = arith.constant 0 : i32
    return %c0_i32, %c0_i32_0 : i32, i32
  }
  func.func @transform_4(%arg0: i32) -> (i32, i32) {
    %c0_i32 = arith.constant 0 : i32
    %c0_i32_0 = arith.constant 0 : i32
    %c0_i32_1 = arith.constant 0 : i32
    return %c0_i32, %c0_i32_0 : i32, i32
  }
  func.func @transform_5(%arg0: i32) -> (i32, i32) {
    %c0_i32 = arith.constant 0 : i32
    %c0_i32_0 = arith.constant 0 : i32
    %c0_i32_1 = arith.constant 0 : i32
    return %c0_i32, %c0_i32_0 : i32, i32
  }
  func.func @transform_6(%arg0: i32) -> (i32, i32) {
    %c0_i32 = arith.constant 0 : i32
    %c0_i32_0 = arith.constant 0 : i32
    %c0_i32_1 = arith.constant 0 : i32
    return %c0_i32, %c0_i32_0 : i32, i32
  }
  func.func @transform_7(%arg0: i32) -> (i32, i32) {
    %c0_i32 = arith.constant 0 : i32
    %c0_i32_0 = arith.constant 0 : i32
    return %c0_i32, %arg0 : i32, i32
  }
}

</mosaic_0001>

<llo_original>
// kernel: tpu_custom_call.1
$region0: #{tpu_custom_call.1}
  #allocation0 [shape = 'u32[]', space=smem, size = 0x4, offset = 0x4, fixed_abs, tag = 'smem constant byte address 0x4 - core index']
  #allocation1 [shape = 'u32[144,128]{1,0:T(1,128)}', space=vmem, size = 0x12000, scoped, tag = 'internal scratch']
  #allocation2 [shape = 'f32[1,1]{1,0:T(1,128)S(1)}', space=vmem, size = 0x200, scoped, tag = 'scoped memory for tpu_custom_call.1']
  %s0 = inlined_call_operand.vmem [shape: f32[32,128], index: 0, kind: input, shape index: {}]
  %s1 = inlined_call_operand.vmem [shape: f32[128,32], index: 1, kind: input, shape index: {}]
  %s2 = inlined_call_operand.vmem [shape: f32[128,1], index: 2, kind: input, shape index: {}]
  %s3 = inlined_call_operand.vmem [shape: f32[64,128], index: 3, kind: input, shape index: {}]
  %s4 = inlined_call_operand.vmem [shape: f32[64,1], index: 4, kind: input, shape index: {}]
  %s5 = inlined_call_operand.vmem [shape: f32[64,1], index: 5, kind: input, shape index: {}]
  %s6 = inlined_call_operand.<no memory space> [shape: f32[1,1], index: 6, kind: input, shape index: {}]
  %s7 = inlined_call_operand.hbm [shape: f32[1,128], index: 7, kind: output, shape index: {}]
  %s8 = sld [smem:[#allocation0]]
  $region38: #{tpu_custom_call.1} parent=0
    _
  %s10 = ssub.s32 1, %s8
  %s11 = scalar_select 0, %s10, %s8
  %v12 = vstv %s6
  %13 = vst [vmem:[#allocation2] sm:$0x1] %v12
  $region1: #{tpu_custom_call.1} parent=0
    #allocation3 [shape = 'u8[512]{0}', space=vmem, size = 0x400, scoped, tag = 'output window, operand 0, single buffered']
    #allocation4 [shape = 's32[1]{0}', space=sflag, size = 0x4, scoped, tag = 'scoped memory for tpu_custom_call.1']
    %14 = vsyncpa [#allocation4], 0
    // Predicated region
    $region2: #{tpu_custom_call.1} parent=1 // pred_check
      _
    $region3: #{tpu_custom_call.1} parent=1 // pred_check_branch
      %16 = sbr.rel (0) target = $region5
    $region4: #{tpu_custom_call.1} parent=1 // pred_region
      _
    $region5: #{tpu_custom_call.1} parent=1 // pred_fallthru
      _
    // Predicated region
    $region6: #{tpu_custom_call.1} parent=1 // pred_check
      _
    $region7: #{tpu_custom_call.1} parent=1 // pred_check_branch
      %18 = sbr.rel (0) target = $region9
    $region8: #{tpu_custom_call.1} parent=1 // pred_region
      _
    $region9: #{tpu_custom_call.1} parent=1 // pred_fallthru
      _
    // Predicated region
    $region10: #{tpu_custom_call.1} parent=1 // pred_check
      _
    $region11: #{tpu_custom_call.1} parent=1 // pred_check_branch
      %20 = sbr.rel (0) target = $region13
    $region12: #{tpu_custom_call.1} parent=1 // pred_region
      _
    $region13: #{tpu_custom_call.1} parent=1 // pred_fallthru
      _
    // Predicated region
    $region14: #{tpu_custom_call.1} parent=1 // pred_check
      _
    $region15: #{tpu_custom_call.1} parent=1 // pred_check_branch
      %22 = sbr.rel (0) target = $region17
    $region16: #{tpu_custom_call.1} parent=1 // pred_region
      _
    $region17: #{tpu_custom_call.1} parent=1 // pred_fallthru
      _
    // Predicated region
    $region18: #{tpu_custom_call.1} parent=1 // pred_check
      _
    $region19: #{tpu_custom_call.1} parent=1 // pred_check_branch
      %24 = sbr.rel (0) target = $region21
    $region20: #{tpu_custom_call.1} parent=1 // pred_region
      _
    $region21: #{tpu_custom_call.1} parent=1 // pred_fallthru
      _
    // Predicated region
    $region22: #{tpu_custom_call.1} parent=1 // pred_check
      _
    $region23: #{tpu_custom_call.1} parent=1 // pred_check_branch
      %26 = sbr.rel (0) target = $region25
    $region24: #{tpu_custom_call.1} parent=1 // pred_region
      _
    $region25: #{tpu_custom_call.1} parent=1 // pred_fallthru
      _
    // Predicated region
    $region26: #{tpu_custom_call.1} parent=1 // pred_check
      _
    $region27: #{tpu_custom_call.1} parent=1 // pred_check_branch
      %28 = sbr.rel (0) target = $region29
    $region28: #{tpu_custom_call.1} parent=1 // pred_region
      _
    $region29: #{tpu_custom_call.1} parent=1 // pred_fallthru
      _
    %v29 = vld [vmem:[%s0] sm:$0xff]
    %v30 = vld [vmem:[%s0 + $0x8] sm:$0xff]
    %v31 = vld [vmem:[%s0 + $0x10] sm:$0xff]
    %v32 = vld [vmem:[%s0 + $0x18] sm:$0xff]
    %v33 = vld [vmem:[%s1] sm:$0xff]
    %v34 = vld [vmem:[%s1 + $0x8] sm:$0xff]
    %v35 = vld [vmem:[%s1 + $0x10] sm:$0xff]
    %v36 = vld [vmem:[%s1 + $0x18] sm:$0xff]
    %v37 = vld [vmem:[%s1 + $0x20] sm:$0xff]
    %v38 = vld [vmem:[%s1 + $0x28] sm:$0xff]
    %v39 = vld [vmem:[%s1 + $0x30] sm:$0xff]
    %v40 = vld [vmem:[%s1 + $0x38] sm:$0xff]
    %v41 = vld [vmem:[%s1 + $0x40] sm:$0xff]
    %v42 = vld [vmem:[%s1 + $0x48] sm:$0xff]
    %v43 = vld [vmem:[%s1 + $0x50] sm:$0xff]
    %v44 = vld [vmem:[%s1 + $0x58] sm:$0xff]
    %v45 = vld [vmem:[%s1 + $0x60] sm:$0xff]
    %v46 = vld [vmem:[%s1 + $0x68] sm:$0xff]
    %v47 = vld [vmem:[%s1 + $0x70] sm:$0xff]
    %v48 = vld [vmem:[%s1 + $0x78] sm:$0xff]
    %v49 = vld [vmem:[%s2] sm:$0xff]
    %v50 = vld [vmem:[%s2 + $0x8] sm:$0xff]
    %v51 = vld [vmem:[%s2 + $0x10] sm:$0xff]
    %v52 = vld [vmem:[%s2 + $0x18] sm:$0xff]
    %v53 = vld [vmem:[%s2 + $0x20] sm:$0xff]
    %v54 = vld [vmem:[%s2 + $0x28] sm:$0xff]
    %v55 = vld [vmem:[%s2 + $0x30] sm:$0xff]
    %v56 = vld [vmem:[%s2 + $0x38] sm:$0xff]
    %v57 = vld [vmem:[%s2 + $0x40] sm:$0xff]
    %v58 = vld [vmem:[%s2 + $0x48] sm:$0xff]
    %v59 = vld [vmem:[%s2 + $0x50] sm:$0xff]
    %v60 = vld [vmem:[%s2 + $0x58] sm:$0xff]
    %v61 = vld [vmem:[%s2 + $0x60] sm:$0xff]
    %v62 = vld [vmem:[%s2 + $0x68] sm:$0xff]
    %v63 = vld [vmem:[%s2 + $0x70] sm:$0xff]
    %v64 = vld [vmem:[%s2 + $0x78] sm:$0xff]
    %66 = vset.pattern.permute.xlu0 0
    %67 = vperm.xlu0 %66, %v49
    %v68 = vpop.permute.xlu0 %67
    %71 = vset.pattern.permute.xlu0 0
    %72 = vperm.xlu0 %71, %v50
    %v73 = vpop.permute.xlu0 %72
    %76 = vset.pattern.permute.xlu0 0
    %77 = vperm.xlu0 %76, %v51
    %v78 = vpop.permute.xlu0 %77
    %81 = vset.pattern.permute.xlu0 0
    %82 = vperm.xlu0 %81, %v52
    %v83 = vpop.permute.xlu0 %82
    %86 = vset.pattern.permute.xlu0 0
    %87 = vperm.xlu0 %86, %v53
    %v88 = vpop.permute.xlu0 %87
    %91 = vset.pattern.permute.xlu0 0
    %92 = vperm.xlu0 %91, %v54
    %v93 = vpop.permute.xlu0 %92
    %96 = vset.pattern.permute.xlu0 0
    %97 = vperm.xlu0 %96, %v55
    %v98 = vpop.permute.xlu0 %97
    %101 = vset.pattern.permute.xlu0 0
    %102 = vperm.xlu0 %101, %v56
    %v103 = vpop.permute.xlu0 %102
    %106 = vset.pattern.permute.xlu0 0
    %107 = vperm.xlu0 %106, %v57
    %v108 = vpop.permute.xlu0 %107
    %111 = vset.pattern.permute.xlu0 0
    %112 = vperm.xlu0 %111, %v58
    %v113 = vpop.permute.xlu0 %112
    %116 = vset.pattern.permute.xlu0 0
    %117 = vperm.xlu0 %116, %v59
    %v118 = vpop.permute.xlu0 %117
    %121 = vset.pattern.permute.xlu0 0
    %122 = vperm.xlu0 %121, %v60
    %v123 = vpop.permute.xlu0 %122
    %126 = vset.pattern.permute.xlu0 0
    %127 = vperm.xlu0 %126, %v61
    %v128 = vpop.permute.xlu0 %127
    %131 = vset.pattern.permute.xlu0 0
    %132 = vperm.xlu0 %131, %v62
    %v133 = vpop.permute.xlu0 %132
    %136 = vset.pattern.permute.xlu0 0
    %137 = vperm.xlu0 %136, %v63
    %v138 = vpop.permute.xlu0 %137
    %141 = vset.pattern.permute.xlu0 0
    %142 = vperm.xlu0 %141, %v64
    %v143 = vpop.permute.xlu0 %142
    %vm145 = vcmask 261120
    %v147 = vsel %vm145, %v33, 0
    %v150 = vsel %vm145, %v34, 0
    %v153 = vsel %vm145, %v35, 0
    %v156 = vsel %vm145, %v36, 0
    %v159 = vsel %vm145, %v37, 0
    %v162 = vsel %vm145, %v38, 0
    %v165 = vsel %vm145, %v39, 0
    %v168 = vsel %vm145, %v40, 0
    %v171 = vsel %vm145, %v41, 0
    %v174 = vsel %vm145, %v42, 0
    %v177 = vsel %vm145, %v43, 0
    %v180 = vsel %vm145, %v44, 0
    %v183 = vsel %vm145, %v45, 0
    %v186 = vsel %vm145, %v46, 0
    %v189 = vsel %vm145, %v47, 0
    %v192 = vsel %vm145, %v48, 0
    %194 = vmatprep.subr.mxu0 0.0
    %195 = vmatpush1.msra.mxu0 %v29
    %196 = vmatprep.subr.mxu0 0.0
    %197 = vmatpush1.msra.mxu0 %v30
    %198 = vmatprep.subr.mxu0 0.0
    %199 = vmatpush1.msra.mxu0 %v31
    %200 = vmatprep.subr.mxu0 0.0
    %201 = vmatpush1.msra.mxu0 %v32
    %202 = vmatprep.subr.mxu0 0.0
    %203 = vmatpush1.msra.mxu0 0.0
    %204 = vmatprep.subr.mxu0 0.0
    %205 = vmatpush1.msra.mxu0 0.0
    %206 = vmatprep.subr.mxu0 0.0
    %207 = vmatpush1.msra.mxu0 0.0
    %208 = vmatprep.subr.mxu0 0.0
    %209 = vmatpush1.msra.mxu0 0.0
    %210 = vmatprep.subr.mxu0 0.0
    %211 = vmatpush1.msra.mxu0 0.0
    %212 = vmatprep.subr.mxu0 0.0
    %213 = vmatpush1.msra.mxu0 0.0
    %214 = vmatprep.subr.mxu0 0.0
    %215 = vmatpush1.msra.mxu0 0.0
    %216 = vmatprep.subr.mxu0 0.0
    %217 = vmatpush1.msra.mxu0 0.0
    %218 = vmatprep.subr.mxu0 0.0
    %219 = vmatpush1.msra.mxu0 0.0
    %220 = vmatprep.subr.mxu0 0.0
    %221 = vmatpush1.msra.mxu0 0.0
    %222 = vmatprep.subr.mxu0 0.0
    %223 = vmatpush1.msra.mxu0 0.0
    %224 = vmatprep.subr.mxu0 0.0
    %225 = vmatpush1.msra.mxu0 0.0
    %226 = vmatprep.subr.mxu0 0.0
    %227 = vmatpush1.msra.mxu0 0.0
    %228 = vmatprep.subr.mxu0 0.0
    %229 = vmatpush1.msra.mxu0 0.0
    %230 = vmatprep.subr.mxu0 0.0
    %231 = vmatpush1.msra.mxu0 0.0
    %232 = vmatprep.subr.mxu0 0.0
    %233 = vmatpush1.msra.mxu0 0.0
    %234 = vmatprep.subr.mxu0 0.0
    %235 = vmatpush1.msra.mxu0 0.0
    %236 = vmatprep.subr.mxu0 0.0
    %237 = vmatpush1.msra.mxu0 0.0
    %238 = vmatprep.subr.mxu0 0.0
    %239 = vmatpush1.msra.mxu0 0.0
    %240 = vmatprep.subr.mxu0 0.0
    %241 = vmatpush1.msra.mxu0 0.0
    %242 = vmatprep.subr.mxu0 0.0
    %243 = vmatpush1.msra.mxu0 0.0
    %244 = vmatprep.subr.mxu0 0.0
    %245 = vmatpush1.msra.mxu0 0.0
    %246 = vmatprep.subr.mxu0 0.0
    %247 = vmatpush1.msra.mxu0 0.0
    %248 = vmatprep.subr.mxu0 0.0
    %249 = vmatpush1.msra.mxu0 0.0
    %250 = vmatprep.subr.mxu0 0.0
    %251 = vmatpush1.msra.mxu0 0.0
    %252 = vmatprep.subr.mxu0 0.0
    %253 = vmatpush1.msra.mxu0 0.0
    %254 = vmatprep.subr.mxu0 0.0
    %255 = vmatpush1.msra.mxu0 0.0
    %256 = vmatprep.subr.mxu0 0.0
    %257 = vmatpush1.msra.mxu0 0.0
    %258 = vmatprep.mubr.f32.mxu0 0.0
    %259 = vmatmul.mubr.f32.gmra.mrb[0].mxu0 %v147
    %v260 = vpop.f32.mrb[0].mxu0
    %v261 = vadd.f32 %v68, %v260
    %v262 = vpop.f32.mrb[0].mxu0
    %263 = vmatprep.mubr.f32.mxu0 0.0
    %264 = vmatmul.mubr.f32.gmra.mrb[0].mxu0 %v150
    %v265 = vpop.f32.mrb[0].mxu0
    %v266 = vadd.f32 %v73, %v265
    %v267 = vpop.f32.mrb[0].mxu0
    %268 = vmatprep.mubr.f32.mxu0 0.0
    %269 = vmatmul.mubr.f32.gmra.mrb[0].mxu0 %v153
    %v270 = vpop.f32.mrb[0].mxu0
    %v271 = vadd.f32 %v78, %v270
    %v272 = vpop.f32.mrb[0].mxu0
    %273 = vmatprep.mubr.f32.mxu0 0.0
    %274 = vmatmul.mubr.f32.gmra.mrb[0].mxu0 %v156
    %v275 = vpop.f32.mrb[0].mxu0
    %v276 = vadd.f32 %v83, %v275
    %v277 = vpop.f32.mrb[0].mxu0
    %278 = vmatprep.mubr.f32.mxu0 0.0
    %279 = vmatmul.mubr.f32.gmra.mrb[0].mxu0 %v159
    %v280 = vpop.f32.mrb[0].mxu0
    %v281 = vadd.f32 %v88, %v280
    %v282 = vpop.f32.mrb[0].mxu0
    %283 = vmatprep.mubr.f32.mxu0 0.0
    %284 = vmatmul.mubr.f32.gmra.mrb[0].mxu0 %v162
    %v285 = vpop.f32.mrb[0].mxu0
    %v286 = vadd.f32 %v93, %v285
    %v287 = vpop.f32.mrb[0].mxu0
    %288 = vmatprep.mubr.f32.mxu0 0.0
    %289 = vmatmul.mubr.f32.gmra.mrb[0].mxu0 %v165
    %v290 = vpop.f32.mrb[0].mxu0
    %v291 = vadd.f32 %v98, %v290
    %v292 = vpop.f32.mrb[0].mxu0
    %293 = vmatprep.mubr.f32.mxu0 0.0
    %294 = vmatmul.mubr.f32.gmra.mrb[0].mxu0 %v168
    %v295 = vpop.f32.mrb[0].mxu0
    %v296 = vadd.f32 %v103, %v295
    %v297 = vpop.f32.mrb[0].mxu0
    %298 = vmatprep.mubr.f32.mxu0 0.0
    %299 = vmatmul.mubr.f32.gmra.mrb[0].mxu0 %v171
    %v300 = vpop.f32.mrb[0].mxu0
    %v301 = vadd.f32 %v108, %v300
    %v302 = vpop.f32.mrb[0].mxu0
    %303 = vmatprep.mubr.f32.mxu0 0.0
    %304 = vmatmul.mubr.f32.gmra.mrb[0].mxu0 %v174
    %v305 = vpop.f32.mrb[0].mxu0
    %v306 = vadd.f32 %v113, %v305
    %v307 = vpop.f32.mrb[0].mxu0
    %308 = vmatprep.mubr.f32.mxu0 0.0
    %309 = vmatmul.mubr.f32.gmra.mrb[0].mxu0 %v177
    %v310 = vpop.f32.mrb[0].mxu0
    %v311 = vadd.f32 %v118, %v310
    %v312 = vpop.f32.mrb[0].mxu0
    %313 = vmatprep.mubr.f32.mxu0 0.0
    %314 = vmatmul.mubr.f32.gmra.mrb[0].mxu0 %v180
    %v315 = vpop.f32.mrb[0].mxu0
    %v316 = vadd.f32 %v123, %v315
    %v317 = vpop.f32.mrb[0].mxu0
    %318 = vmatprep.mubr.f32.mxu0 0.0
    %319 = vmatmul.mubr.f32.gmra.mrb[0].mxu0 %v183
    %v320 = vpop.f32.mrb[0].mxu0
    %v321 = vadd.f32 %v128, %v320
    %v322 = vpop.f32.mrb[0].mxu0
    %323 = vmatprep.mubr.f32.mxu0 0.0
    %324 = vmatmul.mubr.f32.gmra.mrb[0].mxu0 %v186
    %v325 = vpop.f32.mrb[0].mxu0
    %v326 = vadd.f32 %v133, %v325
    %v327 = vpop.f32.mrb[0].mxu0
    %328 = vmatprep.mubr.f32.mxu0 0.0
    %329 = vmatmul.mubr.f32.gmra.mrb[0].mxu0 %v189
    %v330 = vpop.f32.mrb[0].mxu0
    %v331 = vadd.f32 %v138, %v330
    %v332 = vpop.f32.mrb[0].mxu0
    %333 = vmatprep.mubr.f32.mxu0 0.0
    %334 = vmatmul.mubr.f32.gmra.mrb[0].mxu0 %v192
    %v335 = vpop.f32.mrb[0].mxu0
    %v336 = vadd.f32 %v143, %v335
    %v337 = vpop.f32.mrb[0].mxu0
    %338 = vdwg.mxu0
    %v339 = vmax.f32 %v261, 0.0
    %v340 = vmax.f32 %v266, 0.0
    %v341 = vmax.f32 %v271, 0.0
    %v342 = vmax.f32 %v276, 0.0
    %v343 = vmax.f32 %v281, 0.0
    %v344 = vmax.f32 %v286, 0.0
    %v345 = vmax.f32 %v291, 0.0
    %v346 = vmax.f32 %v296, 0.0
    %v347 = vmax.f32 %v301, 0.0
    %v348 = vmax.f32 %v306, 0.0
    %v349 = vmax.f32 %v311, 0.0
    %v350 = vmax.f32 %v316, 0.0
    %v351 = vmax.f32 %v321, 0.0
    %v352 = vmax.f32 %v326, 0.0
    %v353 = vmax.f32 %v331, 0.0
    %v354 = vmax.f32 %v336, 0.0
    %v355 = vld [vmem:[%s3] sm:$0xff]
    %v356 = vld [vmem:[%s3 + $0x8] sm:$0xff]
    %v357 = vld [vmem:[%s3 + $0x10] sm:$0xff]
    %v358 = vld [vmem:[%s3 + $0x18] sm:$0xff]
    %v359 = vld [vmem:[%s3 + $0x20] sm:$0xff]
    %v360 = vld [vmem:[%s3 + $0x28] sm:$0xff]
    %v361 = vld [vmem:[%s3 + $0x30] sm:$0xff]
    %v362 = vld [vmem:[%s3 + $0x38] sm:$0xff]
    %v363 = vld [vmem:[%s4] sm:$0xff]
    %v364 = vld [vmem:[%s4 + $0x8] sm:$0xff]
    %v365 = vld [vmem:[%s4 + $0x10] sm:$0xff]
    %v366 = vld [vmem:[%s4 + $0x18] sm:$0xff]
    %v367 = vld [vmem:[%s4 + $0x20] sm:$0xff]
    %v368 = vld [vmem:[%s4 + $0x28] sm:$0xff]
    %v369 = vld [vmem:[%s4 + $0x30] sm:$0xff]
    %v370 = vld [vmem:[%s4 + $0x38] sm:$0xff]
    %372 = vset.pattern.permute.xlu0 0
    %373 = vperm.xlu0 %372, %v363
    %v374 = vpop.permute.xlu0 %373
    %377 = vset.pattern.permute.xlu0 0
    %378 = vperm.xlu0 %377, %v364
    %v379 = vpop.permute.xlu0 %378
    %382 = vset.pattern.permute.xlu0 0
    %383 = vperm.xlu0 %382, %v365
    %v384 = vpop.permute.xlu0 %383
    %387 = vset.pattern.permute.xlu0 0
    %388 = vperm.xlu0 %387, %v366
    %v389 = vpop.permute.xlu0 %388
    %392 = vset.pattern.permute.xlu0 0
    %393 = vperm.xlu0 %392, %v367
    %v394 = vpop.permute.xlu0 %393
    %397 = vset.pattern.permute.xlu0 0
    %398 = vperm.xlu0 %397, %v368
    %v399 = vpop.permute.xlu0 %398
    %402 = vset.pattern.permute.xlu0 0
    %403 = vperm.xlu0 %402, %v369
    %v404 = vpop.permute.xlu0 %403
    %407 = vset.pattern.permute.xlu0 0
    %408 = vperm.xlu0 %407, %v370
    %v409 = vpop.permute.xlu0 %408
    %411 = vmatprep.subr.mxu0 0.0
    %412 = vmatpush1.msra.mxu0 %v339
    %413 = vmatprep.subr.mxu0 0.0
    %414 = vmatpush1.msra.mxu0 %v340
    %415 = vmatprep.subr.mxu0 0.0
    %416 = vmatpush1.msra.mxu0 %v341
    %417 = vmatprep.subr.mxu0 0.0
    %418 = vmatpush1.msra.mxu0 %v342
    %419 = vmatprep.subr.mxu0 0.0
    %420 = vmatpush1.msra.mxu0 %v343
    %421 = vmatprep.subr.mxu0 0.0
    %422 = vmatpush1.msra.mxu0 %v344
    %423 = vmatprep.subr.mxu0 0.0
    %424 = vmatpush1.msra.mxu0 %v345
    %425 = vmatprep.subr.mxu0 0.0
    %426 = vmatpush1.msra.mxu0 %v346
    %427 = vmatprep.subr.mxu0 0.0
    %428 = vmatpush1.msra.mxu0 %v347
    %429 = vmatprep.subr.mxu0 0.0
    %430 = vmatpush1.msra.mxu0 %v348
    %431 = vmatprep.subr.mxu0 0.0
    %432 = vmatpush1.msra.mxu0 %v349
    %433 = vmatprep.subr.mxu0 0.0
    %434 = vmatpush1.msra.mxu0 %v350
    %435 = vmatprep.subr.mxu0 0.0
    %436 = vmatpush1.msra.mxu0 %v351
    %437 = vmatprep.subr.mxu0 0.0
    %438 = vmatpush1.msra.mxu0 %v352
    %439 = vmatprep.subr.mxu0 0.0
    %440 = vmatpush1.msra.mxu0 %v353
    %441 = vmatprep.subr.mxu0 0.0
    %442 = vmatpush1.msra.mxu0 %v354
    %443 = vmatprep.subr.mxu0 0.0
    %444 = vmatpush1.msra.mxu0 0.0
    %445 = vmatprep.subr.mxu0 0.0
    %446 = vmatpush1.msra.mxu0 0.0
    %447 = vmatprep.subr.mxu0 0.0
    %448 = vmatpush1.msra.mxu0 0.0
    %449 = vmatprep.subr.mxu0 0.0
    %450 = vmatpush1.msra.mxu0 0.0
    %451 = vmatprep.subr.mxu0 0.0
    %452 = vmatpush1.msra.mxu0 0.0
    %453 = vmatprep.subr.mxu0 0.0
    %454 = vmatpush1.msra.mxu0 0.0
    %455 = vmatprep.subr.mxu0 0.0
    %456 = vmatpush1.msra.mxu0 0.0
    %457 = vmatprep.subr.mxu0 0.0
    %458 = vmatpush1.msra.mxu0 0.0
    %459 = vmatprep.subr.mxu0 0.0
    %460 = vmatpush1.msra.mxu0 0.0
    %461 = vmatprep.subr.mxu0 0.0
    %462 = vmatpush1.msra.mxu0 0.0
    %463 = vmatprep.subr.mxu0 0.0
    %464 = vmatpush1.msra.mxu0 0.0
    %465 = vmatprep.subr.mxu0 0.0
    %466 = vmatpush1.msra.mxu0 0.0
    %467 = vmatprep.subr.mxu0 0.0
    %468 = vmatpush1.msra.mxu0 0.0
    %469 = vmatprep.subr.mxu0 0.0
    %470 = vmatpush1.msra.mxu0 0.0
    %471 = vmatprep.subr.mxu0 0.0
    %472 = vmatpush1.msra.mxu0 0.0
    %473 = vmatprep.subr.mxu0 0.0
    %474 = vmatpush1.msra.mxu0 0.0
    %475 = vmatprep.mubr.f32.mxu0 0.0
    %476 = vmatmul.mubr.f32.gmra.mrb[0].mxu0 %v355
    %v477 = vpop.f32.mrb[0].mxu0
    %v478 = vadd.f32 %v374, %v477
    %v479 = vpop.f32.mrb[0].mxu0
    %480 = vmatprep.mubr.f32.mxu0 0.0
    %481 = vmatmul.mubr.f32.gmra.mrb[0].mxu0 %v356
    %v482 = vpop.f32.mrb[0].mxu0
    %v483 = vadd.f32 %v379, %v482
    %v484 = vpop.f32.mrb[0].mxu0
    %485 = vmatprep.mubr.f32.mxu0 0.0
    %486 = vmatmul.mubr.f32.gmra.mrb[0].mxu0 %v357
    %v487 = vpop.f32.mrb[0].mxu0
    %v488 = vadd.f32 %v384, %v487
    %v489 = vpop.f32.mrb[0].mxu0
    %490 = vmatprep.mubr.f32.mxu0 0.0
    %491 = vmatmul.mubr.f32.gmra.mrb[0].mxu0 %v358
    %v492 = vpop.f32.mrb[0].mxu0
    %v493 = vadd.f32 %v389, %v492
    %v494 = vpop.f32.mrb[0].mxu0
    %495 = vmatprep.mubr.f32.mxu0 0.0
    %496 = vmatmul.mubr.f32.gmra.mrb[0].mxu0 %v359
    %v497 = vpop.f32.mrb[0].mxu0
    %v498 = vadd.f32 %v394, %v497
    %v499 = vpop.f32.mrb[0].mxu0
    %500 = vmatprep.mubr.f32.mxu0 0.0
    %501 = vmatmul.mubr.f32.gmra.mrb[0].mxu0 %v360
    %v502 = vpop.f32.mrb[0].mxu0
    %v503 = vadd.f32 %v399, %v502
    %v504 = vpop.f32.mrb[0].mxu0
    %505 = vmatprep.mubr.f32.mxu0 0.0
    %506 = vmatmul.mubr.f32.gmra.mrb[0].mxu0 %v361
    %v507 = vpop.f32.mrb[0].mxu0
    %v508 = vadd.f32 %v404, %v507
    %v509 = vpop.f32.mrb[0].mxu0
    %510 = vmatprep.mubr.f32.mxu0 0.0
    %511 = vmatmul.mubr.f32.gmra.mrb[0].mxu0 %v362
    %v512 = vpop.f32.mrb[0].mxu0
    %v513 = vadd.f32 %v409, %v512
    %v514 = vpop.f32.mrb[0].mxu0
    %515 = vdwg.mxu0
    %v516 = vmax.f32 %v478, 0.0
    %v517 = vmax.f32 %v483, 0.0
    %v518 = vmax.f32 %v488, 0.0
    %v519 = vmax.f32 %v493, 0.0
    %v520 = vmax.f32 %v498, 0.0
    %v521 = vmax.f32 %v503, 0.0
    %v522 = vmax.f32 %v508, 0.0
    %v523 = vmax.f32 %v513, 0.0
    %v524 = vld [vmem:[%s5] sm:$0xff]
    %v525 = vld [vmem:[%s5 + $0x8] sm:$0xff]
    %v526 = vld [vmem:[%s5 + $0x10] sm:$0xff]
    %v527 = vld [vmem:[%s5 + $0x18] sm:$0xff]
    %v528 = vld [vmem:[%s5 + $0x20] sm:$0xff]
    %v529 = vld [vmem:[%s5 + $0x28] sm:$0xff]
    %v530 = vld [vmem:[%s5 + $0x30] sm:$0xff]
    %v531 = vld [vmem:[%s5 + $0x38] sm:$0xff]
    %533 = vset.pattern.permute.xlu0 0
    %534 = vperm.xlu0 %533, %v524
    %v535 = vpop.permute.xlu0 %534
    %538 = vset.pattern.permute.xlu0 0
    %539 = vperm.xlu0 %538, %v525
    %v540 = vpop.permute.xlu0 %539
    %543 = vset.pattern.permute.xlu0 0
    %544 = vperm.xlu0 %543, %v526
    %v545 = vpop.permute.xlu0 %544
    %548 = vset.pattern.permute.xlu0 0
    %549 = vperm.xlu0 %548, %v527
    %v550 = vpop.permute.xlu0 %549
    %553 = vset.pattern.permute.xlu0 0
    %554 = vperm.xlu0 %553, %v528
    %v555 = vpop.permute.xlu0 %554
    %558 = vset.pattern.permute.xlu0 0
    %559 = vperm.xlu0 %558, %v529
    %v560 = vpop.permute.xlu0 %559
    %563 = vset.pattern.permute.xlu0 0
    %564 = vperm.xlu0 %563, %v530
    %v565 = vpop.permute.xlu0 %564
    %568 = vset.pattern.permute.xlu0 0
    %569 = vperm.xlu0 %568, %v531
    %v570 = vpop.permute.xlu0 %569
    %v572 = vmul.f32 %v516, %v535
    %v573 = vmul.f32 %v517, %v540
    %v574 = vmul.f32 %v518, %v545
    %v575 = vmul.f32 %v519, %v550
    %v576 = vmul.f32 %v520, %v555
    %v577 = vmul.f32 %v521, %v560
    %v578 = vmul.f32 %v522, %v565
    %v579 = vmul.f32 %v523, %v570
    %v580 = vadd.f32 %v572, %v573
    %v581 = vadd.f32 %v580, %v574
    %v582 = vadd.f32 %v581, %v575
    %v583 = vadd.f32 %v582, %v576
    %v584 = vadd.f32 %v583, %v577
    %v585 = vadd.f32 %v584, %v578
    %v586 = vadd.f32 %v585, %v579
    %v587 = vrot.slane %v586, 4
    %v588 = vadd.f32 %v586, %v587
    %v589 = vrot.slane %v588, 2
    %v590 = vadd.f32 %v588, %v589
    %v591 = vrot.slane %v590, 1
    %v592 = vadd.f32 %v590, %v591
    %v593 = vld [vmem:[#allocation2] sm:$0x1]
    %595 = vset.pattern.permute.xlu0 0
    %596 = vperm.xlu0 %595, %v593
    %v597 = vpop.permute.xlu0 %596
    %v599 = vlaneseq
    %v600 = vshrl.u32 %v599, 7
    %v601 = vsub.s32 0, %v600
    %v602 = vrot.slane %v597, %v601
    %v603 = vadd.f32 %v592, %v602
    %v604 = vxor.u32 %v603, 2147483648
    %v605 = vmul.f32 %v604, 1.442695
    %v606 = vpow.pop %v605
    %v607 = vadd.f32 %v606, 1.0
    %v608 = vrcp.pop %v607
    %v609 = vmul.f32 1.0, %v608
    %610 = vst [vmem:[#allocation3] sm:$0x1] %v609
    // Predicated region
    $region30: #{tpu_custom_call.1} parent=1 // pred_check
      _
    $region31: #{tpu_custom_call.1} parent=1 // pred_check_branch
      %612 = sbr.rel (0) target = $region33
    $region32: #{tpu_custom_call.1} parent=1 // pred_region
      %s614 = ssub.s32 16, 16
      %615 = vsyncadd [#allocation4], %s614
      %s617 = sshll.u32 [#allocation3], 4
      %s618 = int_to_ptr.vmem [resolvable:$true] %s617
      %620 = dma.vmem_to_hbm [thread:$0]  %s618, 16, %s7, [#allocation4]
    $region33: #{tpu_custom_call.1} parent=1 // pred_fallthru
      _
    // Predicated region
    $region34: #{tpu_custom_call.1} parent=1 // pred_check
      _
    $region35: #{tpu_custom_call.1} parent=1 // pred_check_branch
      %622 = sbr.rel (0) target = $region37
    $region36: #{tpu_custom_call.1} parent=1 // pred_region
      %623 = dma.done [#allocation4], 16
    $region37: #{tpu_custom_call.1} parent=1 // pred_fallthru
      _
    %624 = vsyncpa [#allocation4], 1

</llo_original>
